<compile_context>
chip_gen: v7x
topology: tpu7x:2x2x1
jax: 0.10.0
libtpu: 0.0.40
codegen_flags: <defaults>
</compile_context>

<pallas_src>
import jax
import jax.numpy as jnp
from jax.experimental import pallas as pl
from jax.experimental.pallas import tpu as pltpu


def _mlp_kernel(x_ref, w1_ref, b1_ref, w2_ref, b2_ref, o_ref):
    x = x_ref[...]                                    # [TB, F]
    w1 = w1_ref[...]                                  # [H, F]
    # hT = relu(W1 @ x^T + b1)  -> [H, TB]  (NT matmul; TB along the lane dim)
    hT = jax.lax.dot_general(
        w1, x, (((1,), (1,)), ((), ())),
        preferred_element_type=jnp.float32) + b1_ref[...]
    hT = jnp.maximum(hT, 0.0)
    # yT = W2 @ hT + b2  -> [T, TB]         (NN matmul; lane-dense store)
    yT = jnp.dot(w2_ref[...], hT.astype(w2_ref.dtype),
                 preferred_element_type=jnp.float32) + b2_ref[...]
    o_ref[...] = yT.astype(o_ref.dtype)


def _round_up(n, m):
    return ((n + m - 1) // m) * m


def fc_one_deep_twenty_wide(x, w1, b1, w2, b2, *, block_batch=512,
                            compute_dtype=None):
    """x: [B, F]; w1: [20, F]; b1: [20]; w2: [T, 20]; b2: [T]  (PyTorch layout)."""
    B, F = x.shape
    H = w1.shape[0]          # 20
    T = w2.shape[0]          # len_target
    out_dtype = x.dtype

    # Optional bf16 streaming of x / weights (halves the HBM-bound x stream on
    # v6e/v7x; accumulation stays f32). Default keeps exact f32 numerics.
    if compute_dtype is not None:
        x = x.astype(compute_dtype)
        w1 = jnp.asarray(w1, compute_dtype)
        w2 = jnp.asarray(w2, compute_dtype)
    else:
        w1 = jnp.asarray(w1)
        w2 = jnp.asarray(w2)
    # Biases stay f32 (added to the f32 MXU accumulation), shaped as columns.
    b1c = jnp.asarray(b1, jnp.float32).reshape(H, 1)
    b2c = jnp.asarray(b2, jnp.float32).reshape(T, 1)

    # --- batch-tile selection -------------------------------------------------
    in_item = jnp.dtype(x.dtype).itemsize
    out_item = jnp.dtype(out_dtype).itemsize
    # Conservative VMEM budget for the double-buffered x + out blocks; safe on
    # v5e's 16 MiB scoped default and v7x's 64 MiB physical VMEM without
    # touching vmem_limit_bytes.
    budget_bytes = 8 * 1024 * 1024
    per_row = 2 * (F * in_item + T * out_item)          # double-buffered bytes/row
    max_tb = max(128, (budget_bytes // per_row) // 128 * 128)
    tb_cap = min(block_batch, max_tb)
    if _round_up(B, 8) <= tb_cap:
        tb = _round_up(B, 8)                 # single grid step, block == full batch
    else:
        tb = max(128, (tb_cap // 128) * 128)  # multi-step: lane-dense output tiles
    b_pad = _round_up(B, tb)
    if b_pad != B:
        # Pad the ragged last tile with zeros; padded rows are sliced off below.
        x = jnp.pad(x, ((0, b_pad - B), (0, 0)))
    grid = (b_pad // tb,)

    cost = pl.CostEstimate(
        flops=2 * B * H * (F + T),
        transcendentals=0,
        bytes_accessed=(B * F + H * F + T * H + H + T) * in_item
                       + B * T * out_item,
    )

    out_t = pl.pallas_call(
        _mlp_kernel,
        out_shape=jax.ShapeDtypeStruct((T, b_pad), out_dtype),
        grid=grid,
        in_specs=[
            pl.BlockSpec((tb, F), lambda i: (i, 0)),    # x   (streamed per tile)
            pl.BlockSpec((H, F), lambda i: (0, 0)),     # W1  (resident)
            pl.BlockSpec((H, 1), lambda i: (0, 0)),     # b1  (resident)
            pl.BlockSpec((T, H), lambda i: (0, 0)),     # W2  (resident)
            pl.BlockSpec((T, 1), lambda i: (0, 0)),     # b2  (resident)
        ],
        out_specs=pl.BlockSpec((T, tb), lambda i: (0, i)),  # y^T, lane-dense
        compiler_params=pltpu.CompilerParams(
            dimension_semantics=("parallel",)),
        cost_estimate=cost,
    )(x, w1, b1c, w2, b2c)

    # Tiny [T, B_pad] -> [B, T] transpose + unpad in the wrapper (not hot path).
    return out_t.T[:B]


def _init_linear(key, out_dim, in_dim, dtype=jnp.float32):
    """Deterministic init mimicking torch.nn.Linear (uniform +/- 1/sqrt(fan_in))."""
    kw, kb = jax.random.split(key)
    bound = 1.0 / jnp.sqrt(jnp.asarray(in_dim, dtype))
    w = jax.random.uniform(kw, (out_dim, in_dim), dtype, -bound, bound)
    b = jax.random.uniform(kb, (out_dim,), dtype, -bound, bound)
    return w, b


if __name__ == "__main__":
    key = jax.random.PRNGKey(0)
    k_x, k_l1, k_l2 = jax.random.split(key, 3)

    # Small shapes consistent with the module's forward.
    batch, len_feat, hidden, len_target = 200, 32, 20, 4

    x = jax.random.normal(k_x, (batch, len_feat), jnp.float32)
    w1, b1 = _init_linear(k_l1, hidden, len_feat)      # Linear(len_feat, 20)
    w2, b2 = _init_linear(k_l2, len_target, hidden)    # Linear(20, len_target)

    # Pure-JAX reference.
    ref = jnp.maximum(x @ w1.T + b1, 0.0) @ w2.T + b2

    # Default tile (whole batch fits a single lane-dense block).
    out = jax.block_until_ready(fc_one_deep_twenty_wide(x, w1, b1, w2, b2))
    assert out.shape == (batch, len_target)
    assert jnp.allclose(out, ref, atol=3e-5, rtol=3e-5)

    # Small tile to exercise multi-step batch pipelining + ragged-batch padding.
    out2 = jax.block_until_ready(
        fc_one_deep_twenty_wide(x, w1, b1, w2, b2, block_batch=64))
    assert jnp.allclose(out2, ref, atol=3e-5, rtol=3e-5)

    print("KERNEL_OK")
</pallas_src>

<mosaic_0001>
module attributes {stable_mosaic.version = 11 : i64} {
  func.func @_mlp_kernel(%arg0: i32, %arg1: memref<200x32xf32, #tpu.memory_space<vmem>>, %arg2: memref<20x32xf32, #tpu.memory_space<vmem>>, %arg3: memref<20x1xf32, #tpu.memory_space<vmem>>, %arg4: memref<4x20xf32, #tpu.memory_space<vmem>>, %arg5: memref<4x1xf32, #tpu.memory_space<vmem>>, %arg6: memref<4x200xf32, #tpu.memory_space<vmem>>) attributes {dimension_semantics = [#tpu.dimension_semantics<parallel>], iteration_bounds = array<i64: 1>, scalar_prefetch = 0 : i64, scratch_operands = 0 : i64, tpu.core_type = #tpu.core_type<tc>, window_params = [{transform_indices = @transform_0, window_bounds = array<i64: 200, 32>}, {pipeline_mode = #tpu.pipeline_mode<synchronous>, transform_indices = @transform_1, window_bounds = array<i64: 20, 32>}, {pipeline_mode = #tpu.pipeline_mode<synchronous>, transform_indices = @transform_2, window_bounds = array<i64: 20, 1>}, {pipeline_mode = #tpu.pipeline_mode<synchronous>, transform_indices = @transform_3, window_bounds = array<i64: 4, 20>}, {pipeline_mode = #tpu.pipeline_mode<synchronous>, transform_indices = @transform_4, window_bounds = array<i64: 4, 1>}, {transform_indices = @transform_5, window_bounds = array<i64: 4, 200>}]} {
    %c0 = arith.constant 0 : index
    %c0_0 = arith.constant 0 : index
    %0 = vector.load %arg1[%c0, %c0_0] : memref<200x32xf32, #tpu.memory_space<vmem>>, vector<200x32xf32>
    %c0_1 = arith.constant 0 : index
    %c0_2 = arith.constant 0 : index
    %1 = vector.load %arg2[%c0_1, %c0_2] : memref<20x32xf32, #tpu.memory_space<vmem>>, vector<20x32xf32>
    %cst = arith.constant dense<0.000000e+00> : vector<20x200xf32>
    %2 = tpu.matmul %1, %0, %cst {dimension_numbers = #tpu.dot_dimension_numbers<[1], [1], [0], [0], [0, 0, 1, 0], [], []>} : vector<20x32xf32>, vector<200x32xf32>, vector<20x200xf32> -> vector<20x200xf32>
    %c0_3 = arith.constant 0 : index
    %c0_4 = arith.constant 0 : index
    %3 = vector.load %arg3[%c0_3, %c0_4] : memref<20x1xf32, #tpu.memory_space<vmem>>, vector<20x1xf32>
    %4 = vector.broadcast %3 : vector<20x1xf32> to vector<20x200xf32>
    %5 = arith.addf %2, %4 : vector<20x200xf32>
    %cst_5 = arith.constant 0.000000e+00 : f32
    %6 = vector.broadcast %cst_5 : f32 to vector<20x200xf32>
    %7 = arith.maximumf %5, %6 : vector<20x200xf32>
    %c0_6 = arith.constant 0 : index
    %c0_7 = arith.constant 0 : index
    %8 = vector.load %arg4[%c0_6, %c0_7] : memref<4x20xf32, #tpu.memory_space<vmem>>, vector<4x20xf32>
    %cst_8 = arith.constant dense<0.000000e+00> : vector<4x200xf32>
    %9 = tpu.matmul %8, %7, %cst_8 {dimension_numbers = #tpu.dot_dimension_numbers<[1], [0], [0], [1], [0, 0, 1, 1], [], []>} : vector<4x20xf32>, vector<20x200xf32>, vector<4x200xf32> -> vector<4x200xf32>
    %c0_9 = arith.constant 0 : index
    %c0_10 = arith.constant 0 : index
    %10 = vector.load %arg5[%c0_9, %c0_10] : memref<4x1xf32, #tpu.memory_space<vmem>>, vector<4x1xf32>
    %11 = vector.broadcast %10 : vector<4x1xf32> to vector<4x200xf32>
    %12 = arith.addf %9, %11 : vector<4x200xf32>
    %c0_11 = arith.constant 0 : index
    %c0_12 = arith.constant 0 : index
    %13 = vector.load %arg6[%c0_11, %c0_12] : memref<4x200xf32, #tpu.memory_space<vmem>>, vector<4x200xf32>
    tpu.vector_store %arg6[%c0_11, %c0_12], %12 {strides = array<i32>} : memref<4x200xf32, #tpu.memory_space<vmem>>, vector<4x200xf32>,
    return
  }
  func.func @transform_0(%arg0: i32) -> (i32, i32) {
    %c0_i32 = arith.constant 0 : i32
    %c0_i32_0 = arith.constant 0 : i32
    return %arg0, %c0_i32 : i32, i32
  }
  func.func @transform_1(%arg0: i32) -> (i32, i32) {
    %c0_i32 = arith.constant 0 : i32
    %c0_i32_0 = arith.constant 0 : i32
    %c0_i32_1 = arith.constant 0 : i32
    return %c0_i32, %c0_i32_0 : i32, i32
  }
  func.func @transform_2(%arg0: i32) -> (i32, i32) {
    %c0_i32 = arith.constant 0 : i32
    %c0_i32_0 = arith.constant 0 : i32
    %c0_i32_1 = arith.constant 0 : i32
    return %c0_i32, %c0_i32_0 : i32, i32
  }
  func.func @transform_3(%arg0: i32) -> (i32, i32) {
    %c0_i32 = arith.constant 0 : i32
    %c0_i32_0 = arith.constant 0 : i32
    %c0_i32_1 = arith.constant 0 : i32
    return %c0_i32, %c0_i32_0 : i32, i32
  }
  func.func @transform_4(%arg0: i32) -> (i32, i32) {
    %c0_i32 = arith.constant 0 : i32
    %c0_i32_0 = arith.constant 0 : i32
    %c0_i32_1 = arith.constant 0 : i32
    return %c0_i32, %c0_i32_0 : i32, i32
  }
  func.func @transform_5(%arg0: i32) -> (i32, i32) {
    %c0_i32 = arith.constant 0 : i32
    %c0_i32_0 = arith.constant 0 : i32
    return %c0_i32, %arg0 : i32, i32
  }
}

</mosaic_0001>

<llo_original>
// kernel: tpu_custom_call.1
$region0: #{tpu_custom_call.1}
  #allocation0 [shape = 'u32[]', space=smem, size = 0x4, offset = 0x4, fixed_abs, tag = 'smem constant byte address 0x4 - core index']
  #allocation1 [shape = 'u32[144,128]{1,0:T(1,128)}', space=vmem, size = 0x12000, scoped, tag = 'internal scratch']
  %s0 = inlined_call_operand.vmem [shape: f32[200,32], index: 0, kind: input, shape index: {}]
  %s1 = inlined_call_operand.vmem [shape: f32[20,32], index: 1, kind: input, shape index: {}]
  %s2 = inlined_call_operand.vmem [shape: f32[20,1], index: 2, kind: input, shape index: {}]
  %s3 = inlined_call_operand.vmem [shape: f32[4,20], index: 3, kind: input, shape index: {}]
  %s4 = inlined_call_operand.vmem [shape: f32[4,1], index: 4, kind: input, shape index: {}]
  %s5 = inlined_call_operand.hbm [shape: f32[4,200], index: 5, kind: output, shape index: {}]
  %s6 = sld [smem:[#allocation0]]
  $region30: #{tpu_custom_call.1} parent=0
    _
  %s8 = ssub.s32 1, %s6
  %s9 = scalar_select 0, %s8, %s6
  $region1: #{tpu_custom_call.1} parent=0
    #allocation2 [shape = 'u8[4096]{0}', space=vmem, size = 0x1000, scoped, tag = 'output window, operand 0, single buffered']
    #allocation3 [shape = 's32[1]{0}', space=sflag, size = 0x4, scoped, tag = 'scoped memory for tpu_custom_call.1']
    %10 = vsyncpa [#allocation3], 0
    // Predicated region
    $region2: #{tpu_custom_call.1} parent=1 // pred_check
      _
    $region3: #{tpu_custom_call.1} parent=1 // pred_check_branch
      %12 = sbr.rel (0) target = $region5
    $region4: #{tpu_custom_call.1} parent=1 // pred_region
      _
    $region5: #{tpu_custom_call.1} parent=1 // pred_fallthru
      _
    // Predicated region
    $region6: #{tpu_custom_call.1} parent=1 // pred_check
      _
    $region7: #{tpu_custom_call.1} parent=1 // pred_check_branch
      %14 = sbr.rel (0) target = $region9
    $region8: #{tpu_custom_call.1} parent=1 // pred_region
      _
    $region9: #{tpu_custom_call.1} parent=1 // pred_fallthru
      _
    // Predicated region
    $region10: #{tpu_custom_call.1} parent=1 // pred_check
      _
    $region11: #{tpu_custom_call.1} parent=1 // pred_check_branch
      %16 = sbr.rel (0) target = $region13
    $region12: #{tpu_custom_call.1} parent=1 // pred_region
      _
    $region13: #{tpu_custom_call.1} parent=1 // pred_fallthru
      _
    // Predicated region
    $region14: #{tpu_custom_call.1} parent=1 // pred_check
      _
    $region15: #{tpu_custom_call.1} parent=1 // pred_check_branch
      %18 = sbr.rel (0) target = $region17
    $region16: #{tpu_custom_call.1} parent=1 // pred_region
      _
    $region17: #{tpu_custom_call.1} parent=1 // pred_fallthru
      _
    // Predicated region
    $region18: #{tpu_custom_call.1} parent=1 // pred_check
      _
    $region19: #{tpu_custom_call.1} parent=1 // pred_check_branch
      %20 = sbr.rel (0) target = $region21
    $region20: #{tpu_custom_call.1} parent=1 // pred_region
      _
    $region21: #{tpu_custom_call.1} parent=1 // pred_fallthru
      _
    %v21 = vld [vmem:[%s0] sm:$0xff]
    %v22 = vld [vmem:[%s0 + $0x8] sm:$0xff]
    %v23 = vld [vmem:[%s0 + $0x10] sm:$0xff]
    %v24 = vld [vmem:[%s0 + $0x18] sm:$0xff]
    %v25 = vld [vmem:[%s0 + $0x20] sm:$0xff]
    %v26 = vld [vmem:[%s0 + $0x28] sm:$0xff]
    %v27 = vld [vmem:[%s0 + $0x30] sm:$0xff]
    %v28 = vld [vmem:[%s0 + $0x38] sm:$0xff]
    %v29 = vld [vmem:[%s0 + $0x40] sm:$0xff]
    %v30 = vld [vmem:[%s0 + $0x48] sm:$0xff]
    %v31 = vld [vmem:[%s0 + $0x50] sm:$0xff]
    %v32 = vld [vmem:[%s0 + $0x58] sm:$0xff]
    %v33 = vld [vmem:[%s0 + $0x60] sm:$0xff]
    %v34 = vld [vmem:[%s0 + $0x68] sm:$0xff]
    %v35 = vld [vmem:[%s0 + $0x70] sm:$0xff]
    %v36 = vld [vmem:[%s0 + $0x78] sm:$0xff]
    %v37 = vld [vmem:[%s0 + $0x80] sm:$0xff]
    %v38 = vld [vmem:[%s0 + $0x88] sm:$0xff]
    %v39 = vld [vmem:[%s0 + $0x90] sm:$0xff]
    %v40 = vld [vmem:[%s0 + $0x98] sm:$0xff]
    %v41 = vld [vmem:[%s0 + $0xa0] sm:$0xff]
    %v42 = vld [vmem:[%s0 + $0xa8] sm:$0xff]
    %v43 = vld [vmem:[%s0 + $0xb0] sm:$0xff]
    %v44 = vld [vmem:[%s0 + $0xb8] sm:$0xff]
    %v45 = vld [vmem:[%s0 + $0xc0] sm:$0xff]
    %v46 = vld [vmem:[%s1] sm:$0xff]
    %v47 = vld [vmem:[%s1 + $0x8] sm:$0xff]
    %v48 = vld [vmem:[%s1 + $0x10] sm:$0xf]
    %v49 = vld [vmem:[%s2] sm:$0xff]
    %v50 = vld [vmem:[%s2 + $0x8] sm:$0xff]
    %v51 = vld [vmem:[%s2 + $0x10] sm:$0xf]
    %53 = vset.pattern.permute.xlu0 0
    %54 = vperm.xlu0 %53, %v49
    %v55 = vpop.permute.xlu0 %54
    %58 = vset.pattern.permute.xlu0 0
    %59 = vperm.xlu0 %58, %v50
    %v60 = vpop.permute.xlu0 %59
    %63 = vset.pattern.permute.xlu0 0
    %64 = vperm.xlu0 %63, %v51
    %v65 = vpop.permute.xlu0 %64
    %vm67 = vcmask 261120
    %v69 = vsel %vm67, %v46, 0
    %v72 = vsel %vm67, %v47, 0
    %v75 = vsel %vm67, %v48, 0
    %v78 = vsel %vm67, %v21, 0
    %v81 = vsel %vm67, %v22, 0
    %v84 = vsel %vm67, %v23, 0
    %v87 = vsel %vm67, %v24, 0
    %v90 = vsel %vm67, %v25, 0
    %v93 = vsel %vm67, %v26, 0
    %v96 = vsel %vm67, %v27, 0
    %v99 = vsel %vm67, %v28, 0
    %v102 = vsel %vm67, %v29, 0
    %v105 = vsel %vm67, %v30, 0
    %v108 = vsel %vm67, %v31, 0
    %v111 = vsel %vm67, %v32, 0
    %v114 = vsel %vm67, %v33, 0
    %v117 = vsel %vm67, %v34, 0
    %v120 = vsel %vm67, %v35, 0
    %v123 = vsel %vm67, %v36, 0
    %v126 = vsel %vm67, %v37, 0
    %v129 = vsel %vm67, %v38, 0
    %v132 = vsel %vm67, %v39, 0
    %v135 = vsel %vm67, %v40, 0
    %v138 = vsel %vm67, %v41, 0
    %v141 = vsel %vm67, %v42, 0
    %v144 = vsel %vm67, %v43, 0
    %v147 = vsel %vm67, %v44, 0
    %v150 = vsel %vm67, %v45, 0
    %152 = vmatprep.subr.mxu0 0.0
    %153 = vmatpush1.xpose.msra.mxu0 %v78
    %154 = vmatprep.subr.mxu0 0.0
    %155 = vmatpush1.xpose.msra.mxu0 %v81
    %156 = vmatprep.subr.mxu0 0.0
    %157 = vmatpush1.xpose.msra.mxu0 %v84
    %158 = vmatprep.subr.mxu0 0.0
    %159 = vmatpush1.xpose.msra.mxu0 %v87
    %160 = vmatprep.subr.mxu0 0.0
    %161 = vmatpush1.xpose.msra.mxu0 %v90
    %162 = vmatprep.subr.mxu0 0.0
    %163 = vmatpush1.xpose.msra.mxu0 %v93
    %164 = vmatprep.subr.mxu0 0.0
    %165 = vmatpush1.xpose.msra.mxu0 %v96
    %166 = vmatprep.subr.mxu0 0.0
    %167 = vmatpush1.xpose.msra.mxu0 %v99
    %168 = vmatprep.subr.mxu0 0.0
    %169 = vmatpush1.xpose.msra.mxu0 %v102
    %170 = vmatprep.subr.mxu0 0.0
    %171 = vmatpush1.xpose.msra.mxu0 %v105
    %172 = vmatprep.subr.mxu0 0.0
    %173 = vmatpush1.xpose.msra.mxu0 %v108
    %174 = vmatprep.subr.mxu0 0.0
    %175 = vmatpush1.xpose.msra.mxu0 %v111
    %176 = vmatprep.subr.mxu0 0.0
    %177 = vmatpush1.xpose.msra.mxu0 %v114
    %178 = vmatprep.subr.mxu0 0.0
    %179 = vmatpush1.xpose.msra.mxu0 %v117
    %180 = vmatprep.subr.mxu0 0.0
    %181 = vmatpush1.xpose.msra.mxu0 %v120
    %182 = vmatprep.subr.mxu0 0.0
    %183 = vmatpush1.xpose.msra.mxu0 %v123
    %184 = vmatprep.subr.mxu0 0.0
    %185 = vmatpush1.xpose.msra.mxu0 %v126
    %186 = vmatprep.subr.mxu0 0.0
    %187 = vmatpush1.xpose.msra.mxu0 %v129
    %188 = vmatprep.subr.mxu0 0.0
    %189 = vmatpush1.xpose.msra.mxu0 %v132
    %190 = vmatprep.subr.mxu0 0.0
    %191 = vmatpush1.xpose.msra.mxu0 %v135
    %192 = vmatprep.subr.mxu0 0.0
    %193 = vmatpush1.xpose.msra.mxu0 %v138
    %194 = vmatprep.subr.mxu0 0.0
    %195 = vmatpush1.xpose.msra.mxu0 %v141
    %196 = vmatprep.subr.mxu0 0.0
    %197 = vmatpush1.xpose.msra.mxu0 %v144
    %198 = vmatprep.subr.mxu0 0.0
    %199 = vmatpush1.xpose.msra.mxu0 %v147
    %200 = vmatprep.subr.mxu0 0.0
    %201 = vmatpush1.xpose.msra.mxu0 %v150
    %202 = vmatprep.subr.mxu0 0.0
    %203 = vmatpush1.xpose.msra.mxu0 0.0
    %204 = vmatprep.subr.mxu0 0.0
    %205 = vmatpush1.xpose.msra.mxu0 0.0
    %206 = vmatprep.subr.mxu0 0.0
    %207 = vmatpush1.xpose.msra.mxu0 0.0
    %208 = vmatprep.subr.mxu0 0.0
    %209 = vmatpush1.xpose.msra.mxu0 0.0
    %210 = vmatprep.subr.mxu0 0.0
    %211 = vmatpush1.xpose.msra.mxu0 0.0
    %212 = vmatprep.subr.mxu0 0.0
    %213 = vmatpush1.xpose.msra.mxu0 0.0
    %214 = vmatprep.subr.mxu0 0.0
    %215 = vmatpush1.xpose.msra.mxu0 0.0
    %216 = vmatprep.mubr.f32.mxu0 0.0
    %217 = vmatmul.mubr.f32.gmra.mrb[0].mxu0 %v69
    %v218 = vpop.f32.mrb[0].mxu0
    %v219 = vadd.f32 %v55, %v218
    %v220 = vpop.f32.mrb[0].mxu0
    %v221 = vadd.f32 %v55, %v220
    %222 = vmatprep.mubr.f32.mxu0 0.0
    %223 = vmatmul.mubr.f32.gmra.mrb[0].mxu0 %v72
    %v224 = vpop.f32.mrb[0].mxu0
    %v225 = vadd.f32 %v60, %v224
    %v226 = vpop.f32.mrb[0].mxu0
    %v227 = vadd.f32 %v60, %v226
    %228 = vmatprep.mubr.f32.mxu0 0.0
    %229 = vmatmul.mubr.f32.gmra.mrb[0].mxu0 %v75
    %v230 = vpop.f32.mrb[0].mxu0
    %v231 = vadd.f32 %v65, %v230
    %v232 = vpop.f32.mrb[0].mxu0
    %v233 = vadd.f32 %v65, %v232
    %234 = vdwg.mxu0
    %v235 = vmax.f32 %v219, 0.0
    %v236 = vmax.f32 %v221, 0.0
    %v237 = vmax.f32 %v225, 0.0
    %v238 = vmax.f32 %v227, 0.0
    %v239 = vmax.f32 %v231, 0.0
    %v240 = vmax.f32 %v233, 0.0
    %v241 = vld [vmem:[%s3] sm:$0xf]
    %v242 = vld [vmem:[%s4] sm:$0xf]
    %244 = vset.pattern.permute.xlu0 0
    %245 = vperm.xlu0 %244, %v242
    %v246 = vpop.permute.xlu0 %245
    %vm248 = vcmask 162816
    %v250 = vsel %vm248, %v241, 0
    %vm252 = vcmask 1043456
    %v254 = vsel %vm252, %v239, 0
    %v257 = vsel %vm252, %v240, 0
    %259 = vmatprep.subr.mxu0 %v236
    %260 = vmatpush1.msra.mxu0 %v235
    %261 = vmatprep.subr.mxu0 %v238
    %262 = vmatpush1.msra.mxu0 %v237
    %263 = vmatprep.subr.mxu0 %v257
    %264 = vmatpush1.msra.mxu0 %v254
    %265 = vmatprep.subr.mxu0 0.0
    %266 = vmatpush1.msra.mxu0 0.0
    %267 = vmatprep.subr.mxu0 0.0
    %268 = vmatpush1.msra.mxu0 0.0
    %269 = vmatprep.subr.mxu0 0.0
    %270 = vmatpush1.msra.mxu0 0.0
    %271 = vmatprep.subr.mxu0 0.0
    %272 = vmatpush1.msra.mxu0 0.0
    %273 = vmatprep.subr.mxu0 0.0
    %274 = vmatpush1.msra.mxu0 0.0
    %275 = vmatprep.subr.mxu0 0.0
    %276 = vmatpush1.msra.mxu0 0.0
    %277 = vmatprep.subr.mxu0 0.0
    %278 = vmatpush1.msra.mxu0 0.0
    %279 = vmatprep.subr.mxu0 0.0
    %280 = vmatpush1.msra.mxu0 0.0
    %281 = vmatprep.subr.mxu0 0.0
    %282 = vmatpush1.msra.mxu0 0.0
    %283 = vmatprep.subr.mxu0 0.0
    %284 = vmatpush1.msra.mxu0 0.0
    %285 = vmatprep.subr.mxu0 0.0
    %286 = vmatpush1.msra.mxu0 0.0
    %287 = vmatprep.subr.mxu0 0.0
    %288 = vmatpush1.msra.mxu0 0.0
    %289 = vmatprep.subr.mxu0 0.0
    %290 = vmatpush1.msra.mxu0 0.0
    %291 = vmatprep.subr.mxu0 0.0
    %292 = vmatpush1.msra.mxu0 0.0
    %293 = vmatprep.subr.mxu0 0.0
    %294 = vmatpush1.msra.mxu0 0.0
    %295 = vmatprep.subr.mxu0 0.0
    %296 = vmatpush1.msra.mxu0 0.0
    %297 = vmatprep.subr.mxu0 0.0
    %298 = vmatpush1.msra.mxu0 0.0
    %299 = vmatprep.subr.mxu0 0.0
    %300 = vmatpush1.msra.mxu0 0.0
    %301 = vmatprep.subr.mxu0 0.0
    %302 = vmatpush1.msra.mxu0 0.0
    %303 = vmatprep.subr.mxu0 0.0
    %304 = vmatpush1.msra.mxu0 0.0
    %305 = vmatprep.subr.mxu0 0.0
    %306 = vmatpush1.msra.mxu0 0.0
    %307 = vmatprep.subr.mxu0 0.0
    %308 = vmatpush1.msra.mxu0 0.0
    %309 = vmatprep.subr.mxu0 0.0
    %310 = vmatpush1.msra.mxu0 0.0
    %311 = vmatprep.subr.mxu0 0.0
    %312 = vmatpush1.msra.mxu0 0.0
    %313 = vmatprep.subr.mxu0 0.0
    %314 = vmatpush1.msra.mxu0 0.0
    %315 = vmatprep.subr.mxu0 0.0
    %316 = vmatpush1.msra.mxu0 0.0
    %317 = vmatprep.subr.mxu0 0.0
    %318 = vmatpush1.msra.mxu0 0.0
    %319 = vmatprep.subr.mxu0 0.0
    %320 = vmatpush1.msra.mxu0 0.0
    %321 = vmatprep.subr.mxu0 0.0
    %322 = vmatpush1.msra.mxu0 0.0
    %323 = vmatprep.mubr.f32.mxu0 0.0
    %324 = vmatmul.mubr.f32.gmra.mrb[0].mxu0 %v250
    %v325 = vpop.f32.mrb[0].mxu0
    %v326 = vadd.f32 %v246, %v325
    %v327 = vpop.f32.mrb[0].mxu0
    %v328 = vadd.f32 %v246, %v327
    %329 = vdwg.mxu0
    %v332 = vcombine.low %v326, %v328
    %vm334 = vcmask 588804
    %vm335 = vmor %vm334, %vm252
    %336 = vst.msk [vmem:[#allocation2] sm:$0xff] %vm335, %v332
    // Predicated region
    $region22: #{tpu_custom_call.1} parent=1 // pred_check
      _
    $region23: #{tpu_custom_call.1} parent=1 // pred_check_branch
      %338 = sbr.rel (0) target = $region25
    $region24: #{tpu_custom_call.1} parent=1 // pred_region
      %s340 = ssub.s32 128, 128
      %341 = vsyncadd [#allocation3], %s340
      %s343 = sshll.u32 [#allocation2], 4
      %s344 = int_to_ptr.vmem [resolvable:$true] %s343
      %346 = dma.vmem_to_hbm [thread:$0]  %s344, 128, %s5, [#allocation3]
    $region25: #{tpu_custom_call.1} parent=1 // pred_fallthru
      _
    // Predicated region
    $region26: #{tpu_custom_call.1} parent=1 // pred_check
      _
    $region27: #{tpu_custom_call.1} parent=1 // pred_check_branch
      %348 = sbr.rel (0) target = $region29
    $region28: #{tpu_custom_call.1} parent=1 // pred_region
      %349 = dma.done [#allocation3], 128
    $region29: #{tpu_custom_call.1} parent=1 // pred_fallthru
      _
    %350 = vsyncpa [#allocation3], 1

</llo_original>
